<compile_context>
chip_gen: v7x
topology: tpu7x:2x2x1
jax: 0.10.0
libtpu: 0.0.40
codegen_flags: <defaults>
</compile_context>

<pallas_src>
import functools
import math

import numpy as np

import jax
import jax.numpy as jnp
from jax.experimental import pallas as pl
from jax.experimental.pallas import tpu as pltpu


_LANE_CANDIDATES = (512, 256, 128)   # last-dim widths: multiples of 128 -> unmasked vst
_DEFAULT_TILE_ROWS = 1024            # (1024, 512) f32 block = 2 MiB per buffer
_MIN_PALLAS_ELEMS = 1024             # below this, plain jnp beats any kernel launch


def compute_coefficients(alpha: float, n: int) -> np.ndarray:
    """Power-series coefficients of the Gegenbauer polynomial C_n^alpha (float64)."""
    coefficients = np.zeros(n + 1, dtype=np.float64)
    if n == 0:
        coefficients[0] = 1.0
    if n == 1:
        coefficients[1] = 2.0 * alpha
    if n >= 2:
        for k in range(0, n // 2 + 1):
            sgn = (-1.0) ** k
            log_coeff = (
                (n - 2 * k) * math.log(2.0)
                + math.lgamma(n - k + alpha)
                - math.lgamma(alpha)
                - math.lgamma(k + 1)
                - math.lgamma(n - 2 * k + 1)
            )
            coefficients[n - 2 * k] = sgn * math.exp(log_coeff)
    return coefficients


def _poly_eval(x, even_coeffs, odd):
    """sum_k coeffs[k] * x**k exploiting Gegenbauer parity.

    even_coeffs are the nonzero coefficients (indices n, n-2, ...) viewed as a
    polynomial q(t) with t = x*x, so the full polynomial is x**(n%2) * q(x*x).
    Coefficients are Python floats -> compile-time constants.
    """
    acc = jnp.full_like(x, even_coeffs[-1])
    if len(even_coeffs) > 1:
        t = x * x
        for c in reversed(even_coeffs[:-1]):
            acc = acc * t + c
    if odd:
        acc = acc * x
    return acc


def _gegenbauer_kernel(x_ref, o_ref, *, even_coeffs, odd):
    """Elementwise polynomial on a lane-dense (tile_rows, lane) f32 tile."""
    o_ref[...] = _poly_eval(x_ref[...], even_coeffs, odd)


def _round_up(v: int, m: int) -> int:
    return ((v + m - 1) // m) * m


def _split_parity_coeffs(alpha: float, n: int):
    coeffs = compute_coefficients(alpha, n)
    parity = n % 2
    even_coeffs = tuple(float(c) for c in coeffs[parity::2])
    return even_coeffs, bool(parity)


def gegenbauer_forward(x, alpha: float, n: int,
                       tile_rows: int = _DEFAULT_TILE_ROWS,
                       min_pallas_elems: int = _MIN_PALLAS_ELEMS):
    """Batched (or scalar) GegenbauerPolynomials.forward.

    Large, 128-aligned batches go through a lane-dense, zero-copy Pallas TPU
    kernel; everything else (tiny batches, scalar inputs, non-aligned sizes)
    uses a fused-XLA elementwise fallback so we never pay pad/slice HBM
    copies or launch overhead that the kernel cannot win back.
    """
    even_coeffs, odd = _split_parity_coeffs(alpha, n)

    x = jnp.asarray(x, dtype=jnp.float32)
    orig_shape = x.shape
    xf = x.reshape(-1)
    b = xf.shape[0]

    # Pick a lane width that divides the batch exactly (zero-copy reshape),
    # preferring one that also makes `rows` a multiple of 8 (sublane).
    lane = None
    for cand in _LANE_CANDIDATES:
        if b % cand == 0:
            if lane is None:
                lane = cand
            if (b // cand) % 8 == 0:
                lane = cand
                break

    if b < min_pallas_elems or lane is None:
        # Tiny-batch / scalar / non-aligned fallback: one fused XLA elementwise
        # op (same HBM traffic as the kernel, no launch cost, no extra copies).
        return _poly_eval(xf, even_coeffs, odd).reshape(orig_shape)

    rows = b // lane
    x2d = xf.reshape(rows, lane)            # zero-copy (contiguous)

    # Tile-row selection: always a multiple of 8 (sublane) unless it equals the
    # full (small) row extent; never round `rows` up -- the edge block is
    # handled as a masked partial block by Pallas.
    tile_rows = max(8, _round_up(int(tile_rows), 8))
    if rows <= 8:
        tile_rows_eff = rows                # block == full array dim (allowed)
    else:
        tile_rows_eff = min(tile_rows, _round_up(rows, 8))
        if rows >= 16:
            # Keep >= 2 grid steps so the "parallel" axis can be sharded
            # across both TensorCores on v7x (harmless on 1-TC v5e/v6e).
            tile_rows_eff = min(tile_rows_eff, _round_up(pl.cdiv(rows, 2), 8))

    num_steps = pl.cdiv(rows, tile_rows_eff)

    kernel = functools.partial(_gegenbauer_kernel,
                               even_coeffs=even_coeffs, odd=odd)

    out = pl.pallas_call(
        kernel,
        out_shape=jax.ShapeDtypeStruct((rows, lane), jnp.float32),
        grid=(num_steps,),
        in_specs=[pl.BlockSpec((tile_rows_eff, lane), lambda i: (i, 0))],
        out_specs=pl.BlockSpec((tile_rows_eff, lane), lambda i: (i, 0)),
        compiler_params=pltpu.CompilerParams(
            # Mem-bound elementwise kernel: shard the row axis across
            # TensorCores (matters on v7x's 2 TCs).
            dimension_semantics=("parallel",),
            # (1024, 512) f32 in+out double-buffered ~ 8 MiB; headroom for
            # larger tile sweeps while staying under v7x's 32 MiB scoped VMEM.
            vmem_limit_bytes=32 << 20,
        ),
    )(x2d)

    return out.reshape(orig_shape)          # zero-copy


if __name__ == "__main__":
    alpha = 1.5   # e.g. alpha = (d - 2) / 2 for the sphere S^{d-1}
    n = 5         # polynomial degree (odd -> exercises the parity multiply)

    key = jax.random.PRNGKey(0)
    # A batch of scalar inputs in [-1, 1] (cosine of geodesic distance on the
    # sphere), shaped like a small vmapped workload.  2*4*16*16 = 2048 scalars
    # -> exercises the zero-copy Pallas kernel path (lane=256, rows=8).
    x = jax.random.uniform(key, (2, 4, 16, 16), minval=-1.0, maxval=1.0,
                           dtype=jnp.float32)

    out = jax.block_until_ready(gegenbauer_forward(x, alpha, n))

    # Reference: float64 numpy, same math as the torch forward (pow + dot).
    coeffs64 = compute_coefficients(alpha, n)
    powers64 = np.arange(0.0, n + 1.0, dtype=np.float64)
    x64 = np.asarray(x, dtype=np.float64).reshape(-1)
    ref = ((x64[:, None] ** powers64[None, :]) @ coeffs64).reshape(x.shape)

    assert out.shape == x.shape
    assert np.allclose(np.asarray(out, dtype=np.float64), ref, rtol=1e-4, atol=1e-4)

    # Scalar-in -> scalar-out path (exact torch.forward signature); uses the
    # tiny-batch jnp fallback by design.
    out_scalar = jax.block_until_ready(gegenbauer_forward(jnp.float32(0.25), alpha, n))
    assert out_scalar.shape == ()
    ref_scalar = float((np.float64(0.25) ** powers64) @ coeffs64)
    assert abs(float(out_scalar) - ref_scalar) < 1e-4

    # Non-128-aligned batch -> fused-XLA fallback path, same semantics.
    x_odd = jax.random.uniform(jax.random.PRNGKey(1), (37,), minval=-1.0,
                               maxval=1.0, dtype=jnp.float32)
    out_odd = jax.block_until_ready(gegenbauer_forward(x_odd, alpha, n))
    ref_odd = (np.asarray(x_odd, np.float64)[:, None] ** powers64[None, :]) @ coeffs64
    assert np.allclose(np.asarray(out_odd, np.float64), ref_odd, rtol=1e-4, atol=1e-4)

    print("KERNEL_OK")
</pallas_src>

<mosaic_0001>
module attributes {stable_mosaic.version = 11 : i64} {
  func.func @_gegenbauer_kernel(%arg0: i32, %arg1: memref<8x256xf32, #tpu.memory_space<vmem>>, %arg2: memref<8x256xf32, #tpu.memory_space<vmem>>) attributes {dimension_semantics = [#tpu.dimension_semantics<parallel>], iteration_bounds = array<i64: 1>, scalar_prefetch = 0 : i64, scratch_operands = 0 : i64, tpu.core_type = #tpu.core_type<tc>, window_params = [{transform_indices = @transform_0, window_bounds = array<i64: 8, 256>}, {transform_indices = @transform_1, window_bounds = array<i64: 8, 256>}]} {
    %c0 = arith.constant 0 : index
    %c0_0 = arith.constant 0 : index
    %0 = vector.load %arg1[%c0, %c0_0] : memref<8x256xf32, #tpu.memory_space<vmem>>, vector<8x256xf32>
    %cst = arith.constant 8.662500e+01 : f32
    %1 = vector.broadcast %cst : f32 to vector<8x256xf32>
    %2 = arith.mulf %0, %0 : vector<8x256xf32>
    %3 = arith.mulf %1, %2 : vector<8x256xf32>
    %cst_1 = arith.constant -7.875000e+01 : f32
    %4 = vector.broadcast %cst_1 : f32 to vector<8x256xf32>
    %5 = arith.addf %3, %4 : vector<8x256xf32>
    %6 = arith.mulf %5, %2 : vector<8x256xf32>
    %cst_2 = arith.constant 1.312500e+01 : f32
    %7 = vector.broadcast %cst_2 : f32 to vector<8x256xf32>
    %8 = arith.addf %6, %7 : vector<8x256xf32>
    %9 = arith.mulf %8, %0 : vector<8x256xf32>
    %c0_3 = arith.constant 0 : index
    %c0_4 = arith.constant 0 : index
    %10 = vector.load %arg2[%c0_3, %c0_4] : memref<8x256xf32, #tpu.memory_space<vmem>>, vector<8x256xf32>
    tpu.vector_store %arg2[%c0_3, %c0_4], %9 {strides = array<i32>} : memref<8x256xf32, #tpu.memory_space<vmem>>, vector<8x256xf32>,
    return
  }
  func.func @transform_0(%arg0: i32) -> (i32, i32) {
    %c0_i32 = arith.constant 0 : i32
    %c0_i32_0 = arith.constant 0 : i32
    return %arg0, %c0_i32 : i32, i32
  }
  func.func @transform_1(%arg0: i32) -> (i32, i32) {
    %c0_i32 = arith.constant 0 : i32
    %c0_i32_0 = arith.constant 0 : i32
    return %arg0, %c0_i32 : i32, i32
  }
}

</mosaic_0001>

<llo_original>
// kernel: tpu_custom_call.1
$region0: #{tpu_custom_call.1}
  #allocation0 [shape = 'u32[]', space=smem, size = 0x4, offset = 0x4, fixed_abs, tag = 'smem constant byte address 0x4 - core index']
  #allocation1 [shape = 'u32[144,128]{1,0:T(1,128)}', space=vmem, size = 0x12000, scoped, tag = 'internal scratch']
  %s0 = inlined_call_operand.hbm [shape: f32[8,256], index: 0, kind: input, shape index: {}]
  %s1 = inlined_call_operand.hbm [shape: f32[8,256], index: 1, kind: output, shape index: {}]
  %s2 = sld [smem:[#allocation0]]
  $region18: #{tpu_custom_call.1} parent=0
    _
  %s4 = ssub.s32 1, %s2
  %s5 = scalar_select 0, %s4, %s2
  $region1: #{tpu_custom_call.1} parent=0
    #allocation2 [shape = 'u8[8192]{0}', space=vmem, size = 0x2000, scoped, tag = 'input window, operand 0, single buffered']
    #allocation3 [shape = 's32[1]{0}', space=sflag, size = 0x4, scoped, tag = 'scoped memory for tpu_custom_call.1']
    #allocation4 [shape = 's32[1]{0}', space=sflag, size = 0x4, scoped, tag = 'scoped memory for tpu_custom_call.1']
    #allocation5 [shape = 'u8[8192]{0}', space=vmem, size = 0x2000, scoped, tag = 'output window, operand 0, single buffered']
    %6 = vsyncpa [#allocation3], 0
    %7 = vsyncpa [#allocation4], 0
    // Predicated region
    $region2: #{tpu_custom_call.1} parent=1 // pred_check
      _
    $region3: #{tpu_custom_call.1} parent=1 // pred_check_branch
      %9 = sbr.rel (0) target = $region5
    $region4: #{tpu_custom_call.1} parent=1 // pred_region
      %s11 = ssub.s32 256, 256
      %12 = vsyncadd [#allocation3], %s11
      %s14 = sshll.u32 [#allocation2], 4
      %s15 = int_to_ptr.vmem [resolvable:$true] %s14
      %17 = dma.hbm_to_vmem [thread:$0]  %s0, 256, %s15, [#allocation3]
    $region5: #{tpu_custom_call.1} parent=1 // pred_fallthru
      _
    // Predicated region
    $region6: #{tpu_custom_call.1} parent=1 // pred_check
      _
    $region7: #{tpu_custom_call.1} parent=1 // pred_check_branch
      %19 = sbr.rel (0) target = $region9
    $region8: #{tpu_custom_call.1} parent=1 // pred_region
      %20 = dma.done [#allocation3], 256
    $region9: #{tpu_custom_call.1} parent=1 // pred_fallthru
      _
    %v21 = vld [vmem:[#allocation2] sm:$0xff]
    %v22 = vld [vmem:[#allocation2 + $0x8] sm:$0xff]
    %v23 = vmul.f32 %v21, %v21
    %v24 = vmul.f32 %v22, %v22
    %v25 = vmul.f32 %v23, 86.625
    %v26 = vmul.f32 %v24, 86.625
    %v27 = vadd.f32 %v25, -78.75
    %v28 = vadd.f32 %v26, -78.75
    %v29 = vmul.f32 %v27, %v23
    %v30 = vmul.f32 %v28, %v24
    %v31 = vadd.f32 %v29, 13.125
    %v32 = vadd.f32 %v30, 13.125
    %v33 = vmul.f32 %v31, %v21
    %v34 = vmul.f32 %v32, %v22
    %35 = vst [vmem:[#allocation5] sm:$0xff] %v33
    %36 = vst [vmem:[#allocation5 + $0x8] sm:$0xff] %v34
    // Predicated region
    $region10: #{tpu_custom_call.1} parent=1 // pred_check
      _
    $region11: #{tpu_custom_call.1} parent=1 // pred_check_branch
      %38 = sbr.rel (0) target = $region13
    $region12: #{tpu_custom_call.1} parent=1 // pred_region
      %s40 = ssub.s32 256, 256
      %41 = vsyncadd [#allocation4], %s40
      %s43 = sshll.u32 [#allocation5], 4
      %s44 = int_to_ptr.vmem [resolvable:$true] %s43
      %46 = dma.vmem_to_hbm [thread:$0]  %s44, 256, %s1, [#allocation4]
    $region13: #{tpu_custom_call.1} parent=1 // pred_fallthru
      _
    // Predicated region
    $region14: #{tpu_custom_call.1} parent=1 // pred_check
      _
    $region15: #{tpu_custom_call.1} parent=1 // pred_check_branch
      %48 = sbr.rel (0) target = $region17
    $region16: #{tpu_custom_call.1} parent=1 // pred_region
      %49 = dma.done [#allocation4], 256
    $region17: #{tpu_custom_call.1} parent=1 // pred_fallthru
      _
    %50 = vsyncpa [#allocation3], 1
    %51 = vsyncpa [#allocation4], 1

</llo_original>
